<compile_context>
chip_gen: v5e
topology: v5e:2x2
jax: 0.10.0
libtpu: 0.0.40
codegen_flags: <defaults>
</compile_context>

<pallas_src>
import functools

import jax
import jax.numpy as jnp
from jax.experimental import pallas as pl
from jax.experimental.pallas import tpu as pltpu


def _bce_tile_kernel(pred_ref, lab_ref, out_ref, *,
                     samples_per_row, num_classes, class_tile, n_rows,
                     need_row_mask, need_col_mask, bf16_transcendentals):
    """One (row-tile, class-tile) block of stable BCE-with-logits vs an implicit one-hot.

    pred_ref: (TR, L) logits (f32 or bf16), L = 128 (packed) / C / class_tile
    lab_ref:  (TR, g) int32 0-based labels (packed) or (TR, 1) (one sample per row)
    out_ref:  (1, 1, 8, 128) f32 per-tile partial sum (scalar broadcast into the block)
    """
    i = pl.program_id(0)
    j = pl.program_id(1)

    x_raw = pred_ref[...]
    x = x_raw.astype(jnp.float32)
    tr, lanes = x.shape

    lane = jax.lax.broadcasted_iota(jnp.int32, (tr, lanes), 1)

    # ---- one-hot target mask rebuilt in-kernel from integer labels ---------------
    if samples_per_row > 1:
        # Lane-dense packing: each 128-lane row holds `samples_per_row` consecutive
        # samples; slot s occupies lanes [s*C, (s+1)*C).  Exactly one target lane per
        # slot, so OR over a short static unroll.
        y = jnp.zeros((tr, lanes), dtype=jnp.bool_)
        for s in range(samples_per_row):
            lab_s = lab_ref[:, s:s + 1]                       # (TR, 1) int32
            y = y | (lane == (lab_s + s * num_classes))       # target lane of slot s
    else:
        # One sample per row; lanes are a tile of the class dimension.
        cls = j * class_tile + lane
        y = cls == lab_ref[...]                               # (TR,1) broadcast over lanes

    # ---- numerically stable BCE-with-logits: max(x,0) - x*y + log1p(exp(-|x|)) ---
    if bf16_transcendentals:
        soft = jnp.log1p(jnp.exp(-jnp.abs(x_raw.astype(jnp.bfloat16)))).astype(jnp.float32)
    else:
        soft = jnp.log1p(jnp.exp(-jnp.abs(x)))
    elem = jnp.maximum(x, 0.0) - jnp.where(y, x, 0.0) + soft

    # ---- mask grid overhang (rows past n_rows, lanes past num_classes) -----------
    if need_row_mask or need_col_mask:
        row_ok = True
        col_ok = True
        if need_row_mask:
            row = i * tr + jax.lax.broadcasted_iota(jnp.int32, (tr, lanes), 0)
            row_ok = row < n_rows
        if need_col_mask:
            col_ok = (j * class_tile + lane) < num_classes
        valid = jnp.logical_and(row_ok, col_ok)
        elem = jnp.where(valid, elem, 0.0)   # select (not multiply): OOB garbage discarded

    out_ref[...] = jnp.broadcast_to(jnp.sum(elem), out_ref.shape)


def custom_loss_2(pred, target, output_size, *,
                  bf16_transcendentals=False,
                  tile_bytes=4 * 1024 * 1024):
    """pred: [N, output_size] float logits (f32/bf16); target: [N] int labels in 1..output_size."""
    n, c = pred.shape
    assert c == output_size
    labels0 = target.astype(jnp.int32) - 1            # 0-based class indices, (N,)

    # ---- layout selection ---------------------------------------------------------
    if c < 128 and c >= 4 and 128 % c == 0 and n % (128 // c) == 0:
        # Lane-dense packing (bitcast-level reshape): g samples per 128-lane row.
        g = 128 // c
        n_rows = n // g
        lane_w = 128
        class_tile = c            # unused in this mode
        pred2 = pred.reshape(n_rows, lane_w)
        lab2 = labels0.reshape(n_rows, g)
        nct = 1
        need_col_mask = False
    elif c <= 512:
        # One sample per row, whole class dim in the lane axis (block == full extent).
        g = 1
        n_rows = n
        lane_w = c
        class_tile = c
        pred2 = pred
        lab2 = labels0.reshape(n, 1)
        nct = 1
        need_col_mask = False
    else:
        # Large C: 2-D grid tiling the class dimension so VMEM stays bounded.
        g = 1
        n_rows = n
        class_tile = 128 * min(max(c // 128, 1), 4)    # <= 512 lanes, <= C
        lane_w = class_tile
        pred2 = pred
        lab2 = labels0.reshape(n, 1)
        nct = pl.cdiv(c, class_tile)
        need_col_mask = (c % class_tile) != 0

    # ---- row-tile sizing: ~tile_bytes of pred per step, sublane-aligned ------------
    elem_bytes = jnp.dtype(pred.dtype).itemsize
    rows_budget = max(8, (tile_bytes // (lane_w * elem_bytes)) // 8 * 8)
    if n_rows >= 8:
        tr = min(rows_budget, (n_rows // 8) * 8)       # multiple of 8; last block may overhang
    else:
        tr = n_rows                                    # equal to full extent (no overhang)
    need_row_mask = (n_rows % tr) != 0
    nrt = pl.cdiv(n_rows, tr)
    lab_cols = lab2.shape[1]

    kernel = functools.partial(
        _bce_tile_kernel,
        samples_per_row=g,
        num_classes=c,
        class_tile=class_tile,
        n_rows=n_rows,
        need_row_mask=need_row_mask,
        need_col_mask=need_col_mask,
        bf16_transcendentals=bf16_transcendentals,
    )

    partials = pl.pallas_call(
        kernel,
        out_shape=jax.ShapeDtypeStruct((nrt, nct, 8, 128), jnp.float32),
        grid=(nrt, nct),
        in_specs=[
            pl.BlockSpec((tr, lane_w), lambda i, j: (i, j)),
            pl.BlockSpec((tr, lab_cols), lambda i, j: (i, 0)),
        ],
        out_specs=pl.BlockSpec((1, 1, 8, 128), lambda i, j: (i, j, 0, 0)),
        compiler_params=pltpu.CompilerParams(
            dimension_semantics=("parallel", "parallel"),
            vmem_limit_bytes=32 * 1024 * 1024,
        ),
    )(pred2, lab2)

    # Tiny final reduction of the per-tile partials in the wrapper.
    total = jnp.sum(partials[:, :, 0, 0])
    return total * (1.0 / (float(n) * float(c)))


def _reference_loss(pred, target, output_size):
    # Pure-JAX reference mirroring torch.nn.BCEWithLogitsLoss(reduction='mean')
    # against eye(output_size)[target-1].
    y = jax.nn.one_hot(target.astype(jnp.int32) - 1, output_size, dtype=jnp.float32)
    x = pred.astype(jnp.float32)
    elem = jnp.maximum(x, 0.0) - x * y + jnp.log1p(jnp.exp(-jnp.abs(x)))
    return jnp.mean(elem)


if __name__ == "__main__":
    key = jax.random.PRNGKey(0)
    k1, k2, k3, k4, k5, k6 = jax.random.split(key, 6)

    # Case 1: the module's natural small config (packed lane-dense path).
    N, OUTPUT_SIZE = 8, 32
    pred = jax.random.normal(k1, (N, OUTPUT_SIZE), dtype=jnp.float32)
    target = jax.random.randint(k2, (N,), 1, OUTPUT_SIZE + 1, dtype=jnp.int32)
    loss = jax.block_until_ready(custom_loss_2(pred, target, OUTPUT_SIZE))
    ref = _reference_loss(pred, target, OUTPUT_SIZE)
    assert jnp.allclose(loss, ref, rtol=1e-5, atol=1e-5), (loss, ref)

    # Case 2: C does not divide 128 (one-sample-per-row path).
    N2, C2 = 8, 48
    pred2 = jax.random.normal(k3, (N2, C2), dtype=jnp.float32)
    target2 = jax.random.randint(k4, (N2,), 1, C2 + 1, dtype=jnp.int32)
    loss2 = jax.block_until_ready(custom_loss_2(pred2, target2, C2))
    ref2 = _reference_loss(pred2, target2, C2)
    assert jnp.allclose(loss2, ref2, rtol=1e-5, atol=1e-5), (loss2, ref2)

    # Case 3: multi-tile grid with row overhang (exercises the in-kernel row mask).
    N3, C3 = 36, 32
    pred3 = jax.random.normal(k5, (N3, C3), dtype=jnp.float32)
    target3 = jax.random.randint(k6, (N3,), 1, C3 + 1, dtype=jnp.int32)
    loss3 = jax.block_until_ready(custom_loss_2(pred3, target3, C3, tile_bytes=4096))
    ref3 = _reference_loss(pred3, target3, C3)
    assert jnp.allclose(loss3, ref3, rtol=1e-5, atol=1e-5), (loss3, ref3)

    print("KERNEL_OK")
</pallas_src>

<mosaic_0001>
module attributes {stable_mosaic.version = 11 : i64} {
  func.func @_bce_tile_kernel(%arg0: i32, %arg1: i32, %arg2: memref<2x128xf32, #tpu.memory_space<vmem>>, %arg3: memref<2x4xi32, #tpu.memory_space<vmem>>, %arg4: memref<1x1x8x128xf32, #tpu.memory_space<vmem>>) attributes {dimension_semantics = [#tpu.dimension_semantics<parallel>, #tpu.dimension_semantics<parallel>], iteration_bounds = array<i64: 1, 1>, scalar_prefetch = 0 : i64, scratch_operands = 0 : i64, tpu.core_type = #tpu.core_type<tc>, window_params = [{transform_indices = @transform_0, window_bounds = array<i64: 2, 128>}, {transform_indices = @transform_1, window_bounds = array<i64: 2, 4>}, {transform_indices = @transform_2, window_bounds = array<i64: 1, 1, 8, 128>}]} {
    %c0 = arith.constant 0 : index
    %c0_0 = arith.constant 0 : index
    %0 = vector.load %arg2[%c0, %c0_0] : memref<2x128xf32, #tpu.memory_space<vmem>>, vector<2x128xf32>
    %1 = tpu.iota {dimensions = array<i32: 1>} : vector<2x128xi32>
    %false = arith.constant false
    %2 = vector.broadcast %false : i1 to vector<2x128xi1>
    %c0_1 = arith.constant 0 : index
    %c0_2 = arith.constant 0 : index
    %3 = vector.load %arg3[%c0_1, %c0_2] : memref<2x4xi32, #tpu.memory_space<vmem>>, vector<2x1xi32>
    %c0_i32 = arith.constant 0 : i32
    %4 = vector.broadcast %c0_i32 : i32 to vector<2x1xi32>
    %5 = arith.addi %3, %4 : vector<2x1xi32>
    %6 = vector.broadcast %5 : vector<2x1xi32> to vector<2x128xi32>
    %7 = arith.cmpi eq, %1, %6 : vector<2x128xi32>
    %8 = arith.ori %2, %7 : vector<2x128xi1>
    %c0_3 = arith.constant 0 : index
    %c1 = arith.constant 1 : index
    %9 = vector.load %arg3[%c0_3, %c1] : memref<2x4xi32, #tpu.memory_space<vmem>>, vector<2x1xi32>
    %c32_i32 = arith.constant 32 : i32
    %10 = vector.broadcast %c32_i32 : i32 to vector<2x1xi32>
    %11 = arith.addi %9, %10 : vector<2x1xi32>
    %12 = vector.broadcast %11 : vector<2x1xi32> to vector<2x128xi32>
    %13 = arith.cmpi eq, %1, %12 : vector<2x128xi32>
    %14 = arith.ori %8, %13 : vector<2x128xi1>
    %c0_4 = arith.constant 0 : index
    %c2 = arith.constant 2 : index
    %15 = vector.load %arg3[%c0_4, %c2] : memref<2x4xi32, #tpu.memory_space<vmem>>, vector<2x1xi32>
    %c64_i32 = arith.constant 64 : i32
    %16 = vector.broadcast %c64_i32 : i32 to vector<2x1xi32>
    %17 = arith.addi %15, %16 : vector<2x1xi32>
    %18 = vector.broadcast %17 : vector<2x1xi32> to vector<2x128xi32>
    %19 = arith.cmpi eq, %1, %18 : vector<2x128xi32>
    %20 = arith.ori %14, %19 : vector<2x128xi1>
    %c0_5 = arith.constant 0 : index
    %c3 = arith.constant 3 : index
    %21 = vector.load %arg3[%c0_5, %c3] : memref<2x4xi32, #tpu.memory_space<vmem>>, vector<2x1xi32>
    %c96_i32 = arith.constant 96 : i32
    %22 = vector.broadcast %c96_i32 : i32 to vector<2x1xi32>
    %23 = arith.addi %21, %22 : vector<2x1xi32>
    %24 = vector.broadcast %23 : vector<2x1xi32> to vector<2x128xi32>
    %25 = arith.cmpi eq, %1, %24 : vector<2x128xi32>
    %26 = arith.ori %20, %25 : vector<2x128xi1>
    %27 = math.absf %0 : vector<2x128xf32>
    %cst = arith.constant 0.000000e+00 : f32
    %28 = vector.broadcast %cst : f32 to vector<2x128xf32>
    %29 = arith.subf %28, %27 : vector<2x128xf32>
    %30 = math.exp %29 : vector<2x128xf32>
    %31 = math.log1p %30 : vector<2x128xf32>
    %cst_6 = arith.constant 0.000000e+00 : f32
    %32 = vector.broadcast %cst_6 : f32 to vector<2x128xf32>
    %33 = arith.maximumf %0, %32 : vector<2x128xf32>
    %cst_7 = arith.constant 0.000000e+00 : f32
    %34 = vector.broadcast %cst_7 : f32 to vector<2x128xf32>
    %35 = arith.select %26, %0, %34 : vector<2x128xi1>, vector<2x128xf32>
    %36 = arith.subf %33, %35 : vector<2x128xf32>
    %37 = arith.addf %36, %31 : vector<2x128xf32>
    %38 = vector.shape_cast %37 : vector<2x128xf32> to vector<1x2x128xf32>
    %cst_8 = arith.constant dense<0.000000e+00> : vector<1xf32>
    %39 = vector.multi_reduction <add>, %38, %cst_8 [1, 2] : vector<1x2x128xf32> to vector<1xf32>
    %40 = vector.shape_cast %39 : vector<1xf32> to vector<1x1x1xf32>
    %41 = vector.extract %40[0, 0, 0] : f32 from vector<1x1x1xf32>
    %42 = vector.broadcast %41 : f32 to vector<1x1x8x128xf32>
    %c0_9 = arith.constant 0 : index
    %c0_10 = arith.constant 0 : index
    %c0_11 = arith.constant 0 : index
    %c0_12 = arith.constant 0 : index
    %43 = vector.load %arg4[%c0_9, %c0_10, %c0_11, %c0_12] : memref<1x1x8x128xf32, #tpu.memory_space<vmem>>, vector<1x1x8x128xf32>
    tpu.vector_store %arg4[%c0_9, %c0_10, %c0_11, %c0_12], %42 {strides = array<i32>} : memref<1x1x8x128xf32, #tpu.memory_space<vmem>>, vector<1x1x8x128xf32>,
    return
  }
  func.func @transform_0(%arg0: i32, %arg1: i32) -> (i32, i32) {
    %c0_i32 = arith.constant 0 : i32
    return %arg0, %arg1 : i32, i32
  }
  func.func @transform_1(%arg0: i32, %arg1: i32) -> (i32, i32) {
    %c0_i32 = arith.constant 0 : i32
    %c0_i32_0 = arith.constant 0 : i32
    return %arg0, %c0_i32 : i32, i32
  }
  func.func @transform_2(%arg0: i32, %arg1: i32) -> (i32, i32, i32, i32) {
    %c0_i32 = arith.constant 0 : i32
    %c0_i32_0 = arith.constant 0 : i32
    %c0_i32_1 = arith.constant 0 : i32
    return %arg0, %arg1, %c0_i32, %c0_i32_0 : i32, i32, i32, i32
  }
}

</mosaic_0001>

<llo_original>
// kernel: tpu_custom_call.1
$region0: #{tpu_custom_call.1}
  #allocation0 [shape = 'u32[]', space=smem, size = 0x4, offset = 0x4, fixed_abs, tag = 'smem constant byte address 0x4 - core index']
  #allocation1 [shape = 'u32[72,128]{1,0:T(1,128)}', space=vmem, size = 0x9000, scoped, tag = 'internal scratch']
  %s0 = inlined_call_operand.hbm [shape: f32[2,128], index: 0, kind: input, shape index: {}]
  %s1 = inlined_call_operand.hbm [shape: s32[2,4], index: 1, kind: input, shape index: {}]
  %s2 = inlined_call_operand.hbm [shape: f32[1,1,8,128], index: 2, kind: output, shape index: {}]
  %s3 = sld [smem:[#allocation0]]
  $region26: #{tpu_custom_call.1} parent=0
    _
  %s5 = ssub.s32 1, %s3
  %s6 = scalar_select 0, %s5, %s3
  $region1: #{tpu_custom_call.1} parent=0
    #allocation2 [shape = 'u8[1024]{0}', space=vmem, size = 0x400, scoped, tag = 'input window, operand 0, single buffered']
    #allocation3 [shape = 's32[1]{0}', space=sflag, size = 0x4, scoped, tag = 'scoped memory for tpu_custom_call.1']
    #allocation4 [shape = 's32[1]{0}', space=sflag, size = 0x4, scoped, tag = 'scoped memory for tpu_custom_call.1']
    #allocation5 [shape = 'u8[1024]{0}', space=vmem, size = 0x400, scoped, tag = 'input window, operand 1, single buffered']
    #allocation6 [shape = 's32[1]{0}', space=sflag, size = 0x4, scoped, tag = 'scoped memory for tpu_custom_call.1']
    #allocation7 [shape = 'u8[4096]{0}', space=vmem, size = 0x1000, scoped, tag = 'output window, operand 0, single buffered']
    %7 = vsyncpa [#allocation3], 0
    %8 = vsyncpa [#allocation6], 0
    %9 = vsyncpa [#allocation4], 0
    // Predicated region
    $region2: #{tpu_custom_call.1} parent=1 // pred_check
      _
    $region3: #{tpu_custom_call.1} parent=1 // pred_check_branch
      %11 = sbr.rel (0) target = $region5
    $region4: #{tpu_custom_call.1} parent=1 // pred_region
      %13 = vsyncadd [#allocation3], 0
      %s15 = sshll.u32 %s0, 4
      %s16 = int_to_ptr.hbm [resolvable:$true] %s15
      %s17 = sshll.u32 [#allocation2], 4
      %s18 = int_to_ptr.vmem [resolvable:$true] %s17
      %20 = dma.hbm_to_vmem [thread:$0]  %s16, 32, %s18, [#allocation3]
    $region5: #{tpu_custom_call.1} parent=1 // pred_fallthru
      _
    // Predicated region
    $region6: #{tpu_custom_call.1} parent=1 // pred_check
      _
    $region7: #{tpu_custom_call.1} parent=1 // pred_check_branch
      %22 = sbr.rel (0) target = $region9
    $region8: #{tpu_custom_call.1} parent=1 // pred_region
      %24 = vsyncadd [#allocation6], 0
      %s26 = sshll.u32 %s1, 4
      %s27 = int_to_ptr.hbm [resolvable:$true] %s26
      %s28 = sshll.u32 [#allocation5], 4
      %s29 = int_to_ptr.vmem [resolvable:$true] %s28
      %31 = dma.hbm_to_vmem [thread:$0]  %s27, 32, %s29, [#allocation6]
    $region9: #{tpu_custom_call.1} parent=1 // pred_fallthru
      _
    // Predicated region
    $region10: #{tpu_custom_call.1} parent=1 // pred_check
      _
    $region11: #{tpu_custom_call.1} parent=1 // pred_check_branch
      %33 = sbr.rel (0) target = $region13
    $region12: #{tpu_custom_call.1} parent=1 // pred_region
      %35 = dma.done [#allocation3], 32
    $region13: #{tpu_custom_call.1} parent=1 // pred_fallthru
      _
    // Predicated region
    $region14: #{tpu_custom_call.1} parent=1 // pred_check
      _
    $region15: #{tpu_custom_call.1} parent=1 // pred_check_branch
      %37 = sbr.rel (0) target = $region17
    $region16: #{tpu_custom_call.1} parent=1 // pred_region
      %39 = dma.done [#allocation6], 32
    $region17: #{tpu_custom_call.1} parent=1 // pred_fallthru
      _
    %v40 = vld [vmem:[#allocation2] sm:$0x3]
    %v41 = vlaneseq
    %v42 = vand.u32 %v41, 127
    %v43 = vld [vmem:[#allocation5] sm:$0x3]
    %44 = vset.pattern.permute.xlu0 0
    %45 = vperm.xlu0 %44, %v43
    %v46 = vpop.permute.xlu0 %45
    %vm47 = vcmp.eq.s32.totalorder %v42, %v46
    %v48 = vadd.s32 %v43, 32
    %49 = vset.pattern.permute.xlu0 1
    %50 = vperm.xlu0 %49, %v48
    %v51 = vpop.permute.xlu0 %50
    %vm52 = vcmp.eq.s32.totalorder %v42, %v51
    %vm53 = vmor %vm47, %vm52
    %v54 = vadd.s32 %v43, 64
    %55 = vset.pattern.permute.xlu0 2
    %56 = vperm.xlu0 %55, %v54
    %v57 = vpop.permute.xlu0 %56
    %vm58 = vcmp.eq.s32.totalorder %v42, %v57
    %vm59 = vmor %vm53, %vm58
    %v60 = vadd.s32 %v43, 96
    %61 = vset.pattern.permute.xlu0 3
    %62 = vperm.xlu0 %61, %v60
    %v63 = vpop.permute.xlu0 %62
    %vm64 = vcmp.eq.s32.totalorder %v42, %v63
    %vm65 = vmor %vm59, %vm64
    %v66 = vand.u32 2147483647, %v40
    %v67 = vsub.f32 0.0, %v66
    %v68 = vmul.f32 %v67, 1.442695
    %v69 = vpow.pop %v68
    %v70 = vadd.f32 %v69, 1.0
    %v71 = vlog2.pop %v70
    %v72 = vmul.f32 %v71, 0.6931472
    %v73 = vmul.f32 -0.5, %v69
    %v74 = vadd.f32 %v73, 1.0
    %v75 = vmul.f32 %v74, %v69
    %v76 = vand.u32 2147483647, %v69
    %vm77 = vcmp.lt.f32.partialorder %v76, 0.0004427343
    %v78 = vsel %vm77, %v75, %v72
    %v79 = vmax.f32 %v40, 0.0
    %v80 = vsel %vm65, %v40, 0.0
    %v81 = vsub.f32 %v79, %v80
    %v82 = vadd.f32 %v81, %v78
    %vm83 = vcmask 1041408
    %v84 = vsel %vm83, %v82, 0.0
    %85 = vadd.xlane.f32.xlu0 %v84
    %v86 = vpop.xlane.xlu0 %85
    %v87 = vrot.slane %v86, 4
    %v88 = vadd.f32 %v86, %v87
    %v89 = vrot.slane %v88, 2
    %v90 = vadd.f32 %v88, %v89
    %v91 = vrot.slane %v90, 1
    %v92 = vadd.f32 %v90, %v91
    %s93 = vtos %v92
    %v94 = vstv %s93
    %95 = vst [vmem:[#allocation7] sm:$0xff] %v94
    // Predicated region
    $region18: #{tpu_custom_call.1} parent=1 // pred_check
      _
    $region19: #{tpu_custom_call.1} parent=1 // pred_check_branch
      %97 = sbr.rel (0) target = $region21
    $region20: #{tpu_custom_call.1} parent=1 // pred_region
      %99 = vsyncadd [#allocation4], 0
      %s101 = sshll.u32 [#allocation7], 4
      %s102 = int_to_ptr.vmem [resolvable:$true] %s101
      %s103 = sshll.u32 %s2, 4
      %s104 = int_to_ptr.hbm [resolvable:$true] %s103
      %106 = dma.vmem_to_hbm [thread:$0]  %s102, 128, %s104, [#allocation4]
    $region21: #{tpu_custom_call.1} parent=1 // pred_fallthru
      _
    // Predicated region
    $region22: #{tpu_custom_call.1} parent=1 // pred_check
      _
    $region23: #{tpu_custom_call.1} parent=1 // pred_check_branch
      %108 = sbr.rel (0) target = $region25
    $region24: #{tpu_custom_call.1} parent=1 // pred_region
      %110 = dma.done [#allocation4], 128
    $region25: #{tpu_custom_call.1} parent=1 // pred_fallthru
      _
    %111 = vsyncpa [#allocation3], 1
    %112 = vsyncpa [#allocation6], 1
    %113 = vsyncpa [#allocation4], 1

</llo_original>
